<compile_context>
chip_gen: v6e
topology: v6e:2x2x1
jax: 0.10.0
libtpu: 0.0.40
codegen_flags: <defaults>
</compile_context>

<pallas_src>
import functools

import jax
import jax.numpy as jnp
from jax.experimental import pallas as pl
from jax.experimental.pallas import tpu as pltpu

F_IN, H1, H2, OUT = 6, 32, 32, 3
_FLOPS_PER_ROW = 2 * (F_IN * H1 + H1 * H2 + H2 * OUT)   # 2624
_IO_BYTES_PER_ROW = 4 * (F_IN + OUT)                    # 36


def _round_up(x, m):
    return (x + m - 1) // m * m


def _cdiv(a, b):
    return (a + b - 1) // b


def _plan_tiles(batch, tile_b):
    """Pick (lane_tile, n_steps, padded_batch) for the batch dimension."""
    b128 = _round_up(max(batch, 1), 128)
    cap = max(128, min(_round_up(tile_b, 128), b128))
    n = _cdiv(b128, cap)
    if b128 >= 256:
        n = max(n, 2)                     # v7x: give both TensorCores work
    tb = _round_up(_cdiv(b128, n), 128)   # balanced steps -> slop < 128/step
    n = _cdiv(b128, tb)
    return tb, n, n * tb


def _valencenet_kernel(x_ref, w1_ref, b1_ref, w2_ref, b2_ref, w3_ref, b3_ref,
                       o_ref):
    """Fused 3-layer MLP, feature-major (batch on lanes).

    x_ref: [6, tb]   one batch tile, batch on the lane dim
    Wi:    [out, in] (PyTorch layout);  bi: [out, 1]
    o_ref: [3, tb]   lane-dense store
    Dropout(p=0.2) layers are identity in eval mode.
    """
    x = x_ref[...]
    h1 = jnp.dot(w1_ref[...], x, preferred_element_type=jnp.float32)
    h1 = jnp.maximum(h1 + b1_ref[...], 0.0)            # [32, tb]
    # drop1: identity (eval mode)
    h2 = jnp.dot(w2_ref[...], h1, preferred_element_type=jnp.float32)
    h2 = jnp.maximum(h2 + b2_ref[...], 0.0)            # [32, tb]
    # drop2: identity (eval mode)
    o = jnp.dot(w3_ref[...], h2, preferred_element_type=jnp.float32)
    o_ref[...] = (o + b3_ref[...]).astype(o_ref.dtype)  # [3, tb]


def _run_feature_major(xt, params, tb, n_steps, b_pad):
    """xt: [6, b_pad] with b_pad == n_steps * tb.  Returns [3, b_pad]."""
    w1, b1, w2, b2, w3, b3 = (params["w1"], params["b1"], params["w2"],
                              params["b2"], params["w3"], params["b3"])
    assert xt.shape == (F_IN, b_pad)
    assert w1.shape == (H1, F_IN) and b1.shape == (H1, 1)
    assert w2.shape == (H2, H1) and b2.shape == (H2, 1)
    assert w3.shape == (OUT, H2) and b3.shape == (OUT, 1)

    in_specs = [
        pl.BlockSpec((F_IN, tb), lambda i: (0, i)),   # x tile (lane-dense)
        pl.BlockSpec((H1, F_IN), lambda i: (0, 0)),   # W1 (VMEM-resident)
        pl.BlockSpec((H1, 1),    lambda i: (0, 0)),   # b1
        pl.BlockSpec((H2, H1),   lambda i: (0, 0)),   # W2
        pl.BlockSpec((H2, 1),    lambda i: (0, 0)),   # b2
        pl.BlockSpec((OUT, H2),  lambda i: (0, 0)),   # W3
        pl.BlockSpec((OUT, 1),   lambda i: (0, 0)),   # b3
    ]
    out_specs = pl.BlockSpec((OUT, tb), lambda i: (0, i))   # lane-dense store

    weight_bytes = 4 * (H1 * F_IN + H1 + H2 * H1 + H2 + OUT * H2 + OUT)
    cost = pl.CostEstimate(
        flops=_FLOPS_PER_ROW * b_pad,
        transcendentals=0,
        bytes_accessed=_IO_BYTES_PER_ROW * b_pad + weight_bytes,
    )
    # Per-step VMEM: double-buffered in/out blocks (8-sublane padded, ~32B and
    # ~32B per lane) + f32 [32, tb] hidden temporaries -> ~20 MiB at tb=32768.
    # Raise v5e's 16 MiB scoped default; stay under v7x's 64 MiB physical.
    vmem_limit = int(min(64 * 2**20, max(32 * 2**20, 768 * tb)))

    return pl.pallas_call(
        _valencenet_kernel,
        out_shape=jax.ShapeDtypeStruct((OUT, b_pad), jnp.float32),
        grid=(n_steps,),
        in_specs=in_specs,
        out_specs=out_specs,
        compiler_params=pltpu.CompilerParams(
            dimension_semantics=("parallel",),
            vmem_limit_bytes=vmem_limit,
        ),
        cost_estimate=cost,
    )(xt, w1, b1, w2, b2, w3, b3)


@functools.partial(jax.jit, static_argnames=("tile_b",))
def valencenet_forward_feature_major(xt, params, *, tile_b=32768):
    """Zero-relayout fast path: xt [6, B] feature-major -> [3, B].

    No host-side transpose on either boundary; a pad/slice pass is only paid
    when B is not a multiple of the chosen batch tile.
    """
    f_in, batch = xt.shape
    assert f_in == F_IN
    if batch == 0:
        return jnp.zeros((OUT, 0), jnp.float32)
    tb, n_steps, b_pad = _plan_tiles(batch, tile_b)
    xt = xt.astype(jnp.float32)
    if b_pad != batch:
        xt = jnp.pad(xt, ((0, 0), (0, b_pad - batch)))
    out = _run_feature_major(xt, params, tb, n_steps, b_pad)
    return out if b_pad == batch else out[:, :batch]


@functools.partial(jax.jit, static_argnames=("tile_b",))
def valencenet_forward(x, params, *, tile_b=32768):
    """PyTorch-layout wrapper: x [B, 6] -> [B, 3] (eval-mode forward).

    Pays one fused transpose+pad pass on the input and one slice+transpose on
    the output; use `valencenet_forward_feature_major` to avoid both.
    """
    batch, f_in = x.shape
    assert f_in == F_IN
    if batch == 0:
        return jnp.zeros((0, OUT), jnp.float32)
    tb, n_steps, b_pad = _plan_tiles(batch, tile_b)
    xt = (jnp.zeros((F_IN, b_pad), jnp.float32)
          .at[:, :batch].set(x.T.astype(jnp.float32)))
    out_t = _run_feature_major(xt, params, tb, n_steps, b_pad)
    return out_t[:, :batch].T


def init_params(key):
    """nn.Linear default init (U(+-1/sqrt(fan_in))); weights [out, in],
    biases [out, 1]."""
    def linear(k, fan_in, fan_out):
        kw, kb = jax.random.split(k)
        bound = 1.0 / jnp.sqrt(fan_in)
        w = jax.random.uniform(kw, (fan_out, fan_in), jnp.float32,
                               minval=-bound, maxval=bound)
        b = jax.random.uniform(kb, (fan_out, 1), jnp.float32,
                               minval=-bound, maxval=bound)
        return w, b

    k1, k2, k3 = jax.random.split(key, 3)
    w1, b1 = linear(k1, F_IN, H1)
    w2, b2 = linear(k2, H1, H2)
    w3, b3 = linear(k3, H2, OUT)
    return dict(w1=w1, b1=b1, w2=w2, b2=b2, w3=w3, b3=b3)


def reference_forward(x, p):
    """Pure-JAX reference of the eval-mode PyTorch forward; x: [B, 6]."""
    h1 = jnp.maximum(x @ p["w1"].T + p["b1"][:, 0], 0.0)
    h2 = jnp.maximum(h1 @ p["w2"].T + p["b2"][:, 0], 0.0)
    return h2 @ p["w3"].T + p["b3"][:, 0]


if __name__ == "__main__":
    key = jax.random.PRNGKey(0)
    kp, kx1, kx2, kx3 = jax.random.split(key, 4)
    params = init_params(kp)

    # 1) PyTorch-layout wrapper, tiny batch (single 128-lane tile).
    x_small = jax.random.normal(kx1, (8, F_IN), jnp.float32)
    out_small = jax.block_until_ready(valencenet_forward(x_small, params))
    assert out_small.shape == (8, OUT)
    assert jnp.allclose(out_small, reference_forward(x_small, params),
                        atol=1e-5, rtol=1e-5)

    # 2) PyTorch-layout wrapper, non-multiple batch (pad/slice + 2 grid steps).
    x_odd = jax.random.normal(kx2, (200, F_IN), jnp.float32)
    out_odd = jax.block_until_ready(valencenet_forward(x_odd, params))
    assert out_odd.shape == (200, OUT)
    assert jnp.allclose(out_odd, reference_forward(x_odd, params),
                        atol=1e-5, rtol=1e-5)

    # 3) Feature-major fast path (no host transpose, no pad), 2 grid steps.
    xt_fm = jax.random.normal(kx3, (F_IN, 256), jnp.float32)
    out_fm = jax.block_until_ready(
        valencenet_forward_feature_major(xt_fm, params))
    assert out_fm.shape == (OUT, 256)
    ref_fm = reference_forward(xt_fm.T, params).T
    assert jnp.allclose(out_fm, ref_fm, atol=1e-5, rtol=1e-5)

    print("KERNEL_OK")
</pallas_src>

<mosaic_0001>
module attributes {stable_mosaic.version = 11 : i64} {
  func.func @_valencenet_kernel(%arg0: i32, %arg1: memref<6x128xf32, #tpu.memory_space<vmem>>, %arg2: memref<32x6xf32, #tpu.memory_space<vmem>>, %arg3: memref<32x1xf32, #tpu.memory_space<vmem>>, %arg4: memref<32x32xf32, #tpu.memory_space<vmem>>, %arg5: memref<32x1xf32, #tpu.memory_space<vmem>>, %arg6: memref<3x32xf32, #tpu.memory_space<vmem>>, %arg7: memref<3x1xf32, #tpu.memory_space<vmem>>, %arg8: memref<3x128xf32, #tpu.memory_space<vmem>>) attributes {dimension_semantics = [#tpu.dimension_semantics<parallel>], iteration_bounds = array<i64: 1>, scalar_prefetch = 0 : i64, scratch_operands = 0 : i64, tpu.core_type = #tpu.core_type<tc>, window_params = [{transform_indices = @transform_0, window_bounds = array<i64: 6, 128>}, {pipeline_mode = #tpu.pipeline_mode<synchronous>, transform_indices = @transform_1, window_bounds = array<i64: 32, 6>}, {pipeline_mode = #tpu.pipeline_mode<synchronous>, transform_indices = @transform_2, window_bounds = array<i64: 32, 1>}, {pipeline_mode = #tpu.pipeline_mode<synchronous>, transform_indices = @transform_3, window_bounds = array<i64: 32, 32>}, {pipeline_mode = #tpu.pipeline_mode<synchronous>, transform_indices = @transform_4, window_bounds = array<i64: 32, 1>}, {pipeline_mode = #tpu.pipeline_mode<synchronous>, transform_indices = @transform_5, window_bounds = array<i64: 3, 32>}, {pipeline_mode = #tpu.pipeline_mode<synchronous>, transform_indices = @transform_6, window_bounds = array<i64: 3, 1>}, {transform_indices = @transform_7, window_bounds = array<i64: 3, 128>}]} {
    %c0 = arith.constant 0 : index
    %c0_0 = arith.constant 0 : index
    %0 = vector.load %arg1[%c0, %c0_0] : memref<6x128xf32, #tpu.memory_space<vmem>>, vector<6x128xf32>
    %c0_1 = arith.constant 0 : index
    %c0_2 = arith.constant 0 : index
    %1 = vector.load %arg2[%c0_1, %c0_2] : memref<32x6xf32, #tpu.memory_space<vmem>>, vector<32x6xf32>
    %cst = arith.constant dense<0.000000e+00> : vector<32x128xf32>
    %2 = tpu.matmul %1, %0, %cst {dimension_numbers = #tpu.dot_dimension_numbers<[1], [0], [0], [1], [0, 0, 1, 1], [], []>} : vector<32x6xf32>, vector<6x128xf32>, vector<32x128xf32> -> vector<32x128xf32>
    %c0_3 = arith.constant 0 : index
    %c0_4 = arith.constant 0 : index
    %3 = vector.load %arg3[%c0_3, %c0_4] : memref<32x1xf32, #tpu.memory_space<vmem>>, vector<32x1xf32>
    %4 = vector.broadcast %3 : vector<32x1xf32> to vector<32x128xf32>
    %5 = arith.addf %2, %4 : vector<32x128xf32>
    %cst_5 = arith.constant 0.000000e+00 : f32
    %6 = vector.broadcast %cst_5 : f32 to vector<32x128xf32>
    %7 = arith.maximumf %5, %6 : vector<32x128xf32>
    %c0_6 = arith.constant 0 : index
    %c0_7 = arith.constant 0 : index
    %8 = vector.load %arg4[%c0_6, %c0_7] : memref<32x32xf32, #tpu.memory_space<vmem>>, vector<32x32xf32>
    %cst_8 = arith.constant dense<0.000000e+00> : vector<32x128xf32>
    %9 = tpu.matmul %8, %7, %cst_8 {dimension_numbers = #tpu.dot_dimension_numbers<[1], [0], [0], [1], [0, 0, 1, 1], [], []>} : vector<32x32xf32>, vector<32x128xf32>, vector<32x128xf32> -> vector<32x128xf32>
    %c0_9 = arith.constant 0 : index
    %c0_10 = arith.constant 0 : index
    %10 = vector.load %arg5[%c0_9, %c0_10] : memref<32x1xf32, #tpu.memory_space<vmem>>, vector<32x1xf32>
    %11 = vector.broadcast %10 : vector<32x1xf32> to vector<32x128xf32>
    %12 = arith.addf %9, %11 : vector<32x128xf32>
    %cst_11 = arith.constant 0.000000e+00 : f32
    %13 = vector.broadcast %cst_11 : f32 to vector<32x128xf32>
    %14 = arith.maximumf %12, %13 : vector<32x128xf32>
    %c0_12 = arith.constant 0 : index
    %c0_13 = arith.constant 0 : index
    %15 = vector.load %arg6[%c0_12, %c0_13] : memref<3x32xf32, #tpu.memory_space<vmem>>, vector<3x32xf32>
    %cst_14 = arith.constant dense<0.000000e+00> : vector<3x128xf32>
    %16 = tpu.matmul %15, %14, %cst_14 {dimension_numbers = #tpu.dot_dimension_numbers<[1], [0], [0], [1], [0, 0, 1, 1], [], []>} : vector<3x32xf32>, vector<32x128xf32>, vector<3x128xf32> -> vector<3x128xf32>
    %c0_15 = arith.constant 0 : index
    %c0_16 = arith.constant 0 : index
    %17 = vector.load %arg7[%c0_15, %c0_16] : memref<3x1xf32, #tpu.memory_space<vmem>>, vector<3x1xf32>
    %18 = vector.broadcast %17 : vector<3x1xf32> to vector<3x128xf32>
    %19 = arith.addf %16, %18 : vector<3x128xf32>
    %c0_17 = arith.constant 0 : index
    %c0_18 = arith.constant 0 : index
    %20 = vector.load %arg8[%c0_17, %c0_18] : memref<3x128xf32, #tpu.memory_space<vmem>>, vector<3x128xf32>
    tpu.vector_store %arg8[%c0_17, %c0_18], %19 {strides = array<i32>} : memref<3x128xf32, #tpu.memory_space<vmem>>, vector<3x128xf32>,
    return
  }
  func.func @transform_0(%arg0: i32) -> (i32, i32) {
    %c0_i32 = arith.constant 0 : i32
    %c0_i32_0 = arith.constant 0 : i32
    return %c0_i32, %arg0 : i32, i32
  }
  func.func @transform_1(%arg0: i32) -> (i32, i32) {
    %c0_i32 = arith.constant 0 : i32
    %c0_i32_0 = arith.constant 0 : i32
    %c0_i32_1 = arith.constant 0 : i32
    return %c0_i32, %c0_i32_0 : i32, i32
  }
  func.func @transform_2(%arg0: i32) -> (i32, i32) {
    %c0_i32 = arith.constant 0 : i32
    %c0_i32_0 = arith.constant 0 : i32
    %c0_i32_1 = arith.constant 0 : i32
    return %c0_i32, %c0_i32_0 : i32, i32
  }
  func.func @transform_3(%arg0: i32) -> (i32, i32) {
    %c0_i32 = arith.constant 0 : i32
    %c0_i32_0 = arith.constant 0 : i32
    %c0_i32_1 = arith.constant 0 : i32
    return %c0_i32, %c0_i32_0 : i32, i32
  }
  func.func @transform_4(%arg0: i32) -> (i32, i32) {
    %c0_i32 = arith.constant 0 : i32
    %c0_i32_0 = arith.constant 0 : i32
    %c0_i32_1 = arith.constant 0 : i32
    return %c0_i32, %c0_i32_0 : i32, i32
  }
  func.func @transform_5(%arg0: i32) -> (i32, i32) {
    %c0_i32 = arith.constant 0 : i32
    %c0_i32_0 = arith.constant 0 : i32
    %c0_i32_1 = arith.constant 0 : i32
    return %c0_i32, %c0_i32_0 : i32, i32
  }
  func.func @transform_6(%arg0: i32) -> (i32, i32) {
    %c0_i32 = arith.constant 0 : i32
    %c0_i32_0 = arith.constant 0 : i32
    %c0_i32_1 = arith.constant 0 : i32
    return %c0_i32, %c0_i32_0 : i32, i32
  }
  func.func @transform_7(%arg0: i32) -> (i32, i32) {
    %c0_i32 = arith.constant 0 : i32
    %c0_i32_0 = arith.constant 0 : i32
    return %c0_i32, %arg0 : i32, i32
  }
}

</mosaic_0001>

<llo_original>
// kernel: valencenet_forward.1
$region0: #{valencenet_forward.1}
  #allocation0 [shape = 'u32[]', space=smem, size = 0x4, offset = 0x4, fixed_abs, tag = 'smem constant byte address 0x4 - core index']
  #allocation1 [shape = 'u32[144,128]{1,0:T(1,128)}', space=vmem, size = 0x12000, scoped, tag = 'internal scratch']
  %s0 = inlined_call_operand.vmem [shape: f32[6,128], index: 0, kind: input, shape index: {}]
  %s1 = inlined_call_operand.vmem [shape: f32[32,6], index: 1, kind: input, shape index: {}]
  %s2 = inlined_call_operand.vmem [shape: f32[32,1], index: 2, kind: input, shape index: {}]
  %s3 = inlined_call_operand.vmem [shape: f32[32,32], index: 3, kind: input, shape index: {}]
  %s4 = inlined_call_operand.vmem [shape: f32[32,1], index: 4, kind: input, shape index: {}]
  %s5 = inlined_call_operand.vmem [shape: f32[3,32], index: 5, kind: input, shape index: {}]
  %s6 = inlined_call_operand.vmem [shape: f32[3,1], index: 6, kind: input, shape index: {}]
  %s7 = inlined_call_operand.vmem [shape: f32[3,128], index: 7, kind: output, shape index: {}]
  %s8 = sld [smem:[#allocation0]]
  $region38: #{valencenet_forward.1} parent=0
    _
  %s10 = ssub.s32 1, %s8
  %s11 = scalar_select 0, %s10, %s8
  // Predicated region
  $region2: #{valencenet_forward.1} parent=0 // pred_check
    _
  $region3: #{valencenet_forward.1} parent=0 // pred_check_branch
    %13 = sbr.rel (0) target = $region5
  $region4: #{valencenet_forward.1} parent=0 // pred_region
    _
  $region5: #{valencenet_forward.1} parent=0 // pred_fallthru
    _
  // Predicated region
  $region6: #{valencenet_forward.1} parent=0 // pred_check
    _
  $region7: #{valencenet_forward.1} parent=0 // pred_check_branch
    %15 = sbr.rel (0) target = $region9
  $region8: #{valencenet_forward.1} parent=0 // pred_region
    _
  $region9: #{valencenet_forward.1} parent=0 // pred_fallthru
    _
  // Predicated region
  $region10: #{valencenet_forward.1} parent=0 // pred_check
    _
  $region11: #{valencenet_forward.1} parent=0 // pred_check_branch
    %17 = sbr.rel (0) target = $region13
  $region12: #{valencenet_forward.1} parent=0 // pred_region
    _
  $region13: #{valencenet_forward.1} parent=0 // pred_fallthru
    _
  // Predicated region
  $region14: #{valencenet_forward.1} parent=0 // pred_check
    _
  $region15: #{valencenet_forward.1} parent=0 // pred_check_branch
    %19 = sbr.rel (0) target = $region17
  $region16: #{valencenet_forward.1} parent=0 // pred_region
    _
  $region17: #{valencenet_forward.1} parent=0 // pred_fallthru
    _
  // Predicated region
  $region18: #{valencenet_forward.1} parent=0 // pred_check
    _
  $region19: #{valencenet_forward.1} parent=0 // pred_check_branch
    %21 = sbr.rel (0) target = $region21
  $region20: #{valencenet_forward.1} parent=0 // pred_region
    _
  $region21: #{valencenet_forward.1} parent=0 // pred_fallthru
    _
  // Predicated region
  $region22: #{valencenet_forward.1} parent=0 // pred_check
    _
  $region23: #{valencenet_forward.1} parent=0 // pred_check_branch
    %23 = sbr.rel (0) target = $region25
  $region24: #{valencenet_forward.1} parent=0 // pred_region
    _
  $region25: #{valencenet_forward.1} parent=0 // pred_fallthru
    _
  // Predicated region
  $region26: #{valencenet_forward.1} parent=0 // pred_check
    _
  $region27: #{valencenet_forward.1} parent=0 // pred_check_branch
    %25 = sbr.rel (0) target = $region29
  $region28: #{valencenet_forward.1} parent=0 // pred_region
    _
  $region29: #{valencenet_forward.1} parent=0 // pred_fallthru
    _
  %v26 = vld [vmem:[%s0] sm:$0x3f]
  %v27 = vld [vmem:[%s1] sm:$0xff]
  %v28 = vld [vmem:[%s1 + $0x8] sm:$0xff]
  %v29 = vld [vmem:[%s1 + $0x10] sm:$0xff]
  %v30 = vld [vmem:[%s1 + $0x18] sm:$0xff]
  %v31 = vld [vmem:[%s2] sm:$0xff]
  %v32 = vld [vmem:[%s2 + $0x8] sm:$0xff]
  %v33 = vld [vmem:[%s2 + $0x10] sm:$0xff]
  %v34 = vld [vmem:[%s2 + $0x18] sm:$0xff]
  %36 = vset.pattern.permute.xlu0 0
  %37 = vperm.xlu0 %36, %v31
  %v38 = vpop.permute.xlu0 %37
  %41 = vset.pattern.permute.xlu0 0
  %42 = vperm.xlu0 %41, %v32
  %v43 = vpop.permute.xlu0 %42
  %46 = vset.pattern.permute.xlu0 0
  %47 = vperm.xlu0 %46, %v33
  %v48 = vpop.permute.xlu0 %47
  %51 = vset.pattern.permute.xlu0 0
  %52 = vperm.xlu0 %51, %v34
  %v53 = vpop.permute.xlu0 %52
  %vm55 = vcmask 48128
  %v57 = vsel %vm55, %v27, 0
  %v60 = vsel %vm55, %v28, 0
  %v63 = vsel %vm55, %v29, 0
  %v66 = vsel %vm55, %v30, 0
  %vm68 = vcmask 1045504
  %v70 = vsel %vm68, %v26, 0
  %72 = vmatprep.subr.mxu0 0.0
  %73 = vmatpush1.msra.mxu0 0.0
  %74 = vmatprep.subr.mxu0 0.0
  %75 = vmatpush1.msra.mxu0 0.0
  %76 = vmatprep.subr.mxu0 0.0
  %77 = vmatpush1.msra.mxu0 0.0
  %78 = vmatprep.subr.mxu0 0.0
  %79 = vmatpush1.msra.mxu0 0.0
  %80 = vmatprep.subr.mxu0 0.0
  %81 = vmatpush1.msra.mxu0 0.0
  %82 = vmatprep.subr.mxu0 0.0
  %83 = vmatpush1.msra.mxu0 0.0
  %84 = vmatprep.subr.mxu0 0.0
  %85 = vmatpush1.msra.mxu0 0.0
  %86 = vmatprep.subr.mxu0 0.0
  %87 = vmatpush1.msra.mxu0 0.0
  %88 = vmatprep.subr.mxu0 0.0
  %89 = vmatpush1.msra.mxu0 0.0
  %90 = vmatprep.subr.mxu0 0.0
  %91 = vmatpush1.msra.mxu0 0.0
  %92 = vmatprep.subr.mxu0 0.0
  %93 = vmatpush1.msra.mxu0 0.0
  %94 = vmatprep.subr.mxu0 0.0
  %95 = vmatpush1.msra.mxu0 0.0
  %96 = vmatprep.subr.mxu0 0.0
  %97 = vmatpush1.msra.mxu0 0.0
  %98 = vmatprep.subr.mxu0 0.0
  %99 = vmatpush1.msra.mxu0 0.0
  %100 = vmatprep.subr.mxu0 0.0
  %101 = vmatpush1.msra.mxu0 0.0
  %102 = vmatprep.subr.mxu0 0.0
  %103 = vmatpush1.msra.mxu0 %v70
  %104 = vmatprep.subr.mxu0 0.0
  %105 = vmatpush2.msra.mxu0 0.0
  %106 = vmatprep.subr.mxu0 0.0
  %107 = vmatpush2.msra.mxu0 0.0
  %108 = vmatprep.subr.mxu0 0.0
  %109 = vmatpush2.msra.mxu0 0.0
  %110 = vmatprep.subr.mxu0 0.0
  %111 = vmatpush2.msra.mxu0 0.0
  %112 = vmatprep.subr.mxu0 0.0
  %113 = vmatpush2.msra.mxu0 0.0
  %114 = vmatprep.subr.mxu0 0.0
  %115 = vmatpush2.msra.mxu0 0.0
  %116 = vmatprep.subr.mxu0 0.0
  %117 = vmatpush2.msra.mxu0 0.0
  %118 = vmatprep.subr.mxu0 0.0
  %119 = vmatpush2.msra.mxu0 0.0
  %120 = vmatprep.subr.mxu0 0.0
  %121 = vmatpush2.msra.mxu0 0.0
  %122 = vmatprep.subr.mxu0 0.0
  %123 = vmatpush2.msra.mxu0 0.0
  %124 = vmatprep.subr.mxu0 0.0
  %125 = vmatpush2.msra.mxu0 0.0
  %126 = vmatprep.subr.mxu0 0.0
  %127 = vmatpush2.msra.mxu0 0.0
  %128 = vmatprep.subr.mxu0 0.0
  %129 = vmatpush2.msra.mxu0 0.0
  %130 = vmatprep.subr.mxu0 0.0
  %131 = vmatpush2.msra.mxu0 0.0
  %132 = vmatprep.subr.mxu0 0.0
  %133 = vmatpush2.msra.mxu0 0.0
  %134 = vmatprep.subr.mxu0 0.0
  %135 = vmatpush2.msra.mxu0 0.0
  %136 = vmatprep.mubr.f32.mxu0 0.0
  %137 = vmatmul.mubr.f32.gmra.mxu0 %v57
  %v138 = vpop.f32.mrf.mxu0
  %v139 = vadd.f32 %v38, %v138
  %v140 = vpop.f32.mrf.mxu0
  %141 = vmatprep.mubr.f32.mxu0 0.0
  %142 = vmatmul.mubr.f32.gmra.mxu0 %v60
  %v143 = vpop.f32.mrf.mxu0
  %v144 = vadd.f32 %v43, %v143
  %v145 = vpop.f32.mrf.mxu0
  %146 = vmatprep.mubr.f32.mxu0 0.0
  %147 = vmatmul.mubr.f32.gmra.mxu0 %v63
  %v148 = vpop.f32.mrf.mxu0
  %v149 = vadd.f32 %v48, %v148
  %v150 = vpop.f32.mrf.mxu0
  %151 = vmatprep.mubr.f32.mxu0 0.0
  %152 = vmatmul.mubr.f32.gmra.mxu0 %v66
  %v153 = vpop.f32.mrf.mxu0
  %v154 = vadd.f32 %v53, %v153
  %v155 = vpop.f32.mrf.mxu0
  %156 = vdwg.mxu0
  %v157 = vmax.f32 %v139, 0.0
  %v158 = vmax.f32 %v144, 0.0
  %v159 = vmax.f32 %v149, 0.0
  %v160 = vmax.f32 %v154, 0.0
  %v161 = vld [vmem:[%s3] sm:$0xff]
  %v162 = vld [vmem:[%s3 + $0x8] sm:$0xff]
  %v163 = vld [vmem:[%s3 + $0x10] sm:$0xff]
  %v164 = vld [vmem:[%s3 + $0x18] sm:$0xff]
  %v165 = vld [vmem:[%s4] sm:$0xff]
  %v166 = vld [vmem:[%s4 + $0x8] sm:$0xff]
  %v167 = vld [vmem:[%s4 + $0x10] sm:$0xff]
  %v168 = vld [vmem:[%s4 + $0x18] sm:$0xff]
  %170 = vset.pattern.permute.xlu0 0
  %171 = vperm.xlu0 %170, %v165
  %v172 = vpop.permute.xlu0 %171
  %175 = vset.pattern.permute.xlu0 0
  %176 = vperm.xlu0 %175, %v166
  %v177 = vpop.permute.xlu0 %176
  %180 = vset.pattern.permute.xlu0 0
  %181 = vperm.xlu0 %180, %v167
  %v182 = vpop.permute.xlu0 %181
  %185 = vset.pattern.permute.xlu0 0
  %186 = vperm.xlu0 %185, %v168
  %v187 = vpop.permute.xlu0 %186
  %vm189 = vcmask 261120
  %v191 = vsel %vm189, %v161, 0
  %v194 = vsel %vm189, %v162, 0
  %v197 = vsel %vm189, %v163, 0
  %v200 = vsel %vm189, %v164, 0
  %202 = vmatprep.subr.mxu0 0.0
  %203 = vmatpush1.msra.mxu0 0.0
  %204 = vmatprep.subr.mxu0 0.0
  %205 = vmatpush1.msra.mxu0 0.0
  %206 = vmatprep.subr.mxu0 0.0
  %207 = vmatpush1.msra.mxu0 0.0
  %208 = vmatprep.subr.mxu0 0.0
  %209 = vmatpush1.msra.mxu0 0.0
  %210 = vmatprep.subr.mxu0 0.0
  %211 = vmatpush1.msra.mxu0 0.0
  %212 = vmatprep.subr.mxu0 0.0
  %213 = vmatpush1.msra.mxu0 0.0
  %214 = vmatprep.subr.mxu0 0.0
  %215 = vmatpush1.msra.mxu0 0.0
  %216 = vmatprep.subr.mxu0 0.0
  %217 = vmatpush1.msra.mxu0 0.0
  %218 = vmatprep.subr.mxu0 0.0
  %219 = vmatpush1.msra.mxu0 0.0
  %220 = vmatprep.subr.mxu0 0.0
  %221 = vmatpush1.msra.mxu0 0.0
  %222 = vmatprep.subr.mxu0 0.0
  %223 = vmatpush1.msra.mxu0 0.0
  %224 = vmatprep.subr.mxu0 0.0
  %225 = vmatpush1.msra.mxu0 0.0
  %226 = vmatprep.subr.mxu0 0.0
  %227 = vmatpush1.msra.mxu0 %v160
  %228 = vmatprep.subr.mxu0 0.0
  %229 = vmatpush1.msra.mxu0 %v159
  %230 = vmatprep.subr.mxu0 0.0
  %231 = vmatpush1.msra.mxu0 %v158
  %232 = vmatprep.subr.mxu0 0.0
  %233 = vmatpush1.msra.mxu0 %v157
  %234 = vmatprep.subr.mxu0 0.0
  %235 = vmatpush2.msra.mxu0 0.0
  %236 = vmatprep.subr.mxu0 0.0
  %237 = vmatpush2.msra.mxu0 0.0
  %238 = vmatprep.subr.mxu0 0.0
  %239 = vmatpush2.msra.mxu0 0.0
  %240 = vmatprep.subr.mxu0 0.0
  %241 = vmatpush2.msra.mxu0 0.0
  %242 = vmatprep.subr.mxu0 0.0
  %243 = vmatpush2.msra.mxu0 0.0
  %244 = vmatprep.subr.mxu0 0.0
  %245 = vmatpush2.msra.mxu0 0.0
  %246 = vmatprep.subr.mxu0 0.0
  %247 = vmatpush2.msra.mxu0 0.0
  %248 = vmatprep.subr.mxu0 0.0
  %249 = vmatpush2.msra.mxu0 0.0
  %250 = vmatprep.subr.mxu0 0.0
  %251 = vmatpush2.msra.mxu0 0.0
  %252 = vmatprep.subr.mxu0 0.0
  %253 = vmatpush2.msra.mxu0 0.0
  %254 = vmatprep.subr.mxu0 0.0
  %255 = vmatpush2.msra.mxu0 0.0
  %256 = vmatprep.subr.mxu0 0.0
  %257 = vmatpush2.msra.mxu0 0.0
  %258 = vmatprep.subr.mxu0 0.0
  %259 = vmatpush2.msra.mxu0 0.0
  %260 = vmatprep.subr.mxu0 0.0
  %261 = vmatpush2.msra.mxu0 0.0
  %262 = vmatprep.subr.mxu0 0.0
  %263 = vmatpush2.msra.mxu0 0.0
  %264 = vmatprep.subr.mxu0 0.0
  %265 = vmatpush2.msra.mxu0 0.0
  %266 = vmatprep.mubr.f32.mxu0 0.0
  %267 = vmatmul.mubr.f32.gmra.mxu0 %v191
  %v268 = vpop.f32.mrf.mxu0
  %v269 = vadd.f32 %v172, %v268
  %v270 = vpop.f32.mrf.mxu0
  %271 = vmatprep.mubr.f32.mxu0 0.0
  %272 = vmatmul.mubr.f32.gmra.mxu0 %v194
  %v273 = vpop.f32.mrf.mxu0
  %v274 = vadd.f32 %v177, %v273
  %v275 = vpop.f32.mrf.mxu0
  %276 = vmatprep.mubr.f32.mxu0 0.0
  %277 = vmatmul.mubr.f32.gmra.mxu0 %v197
  %v278 = vpop.f32.mrf.mxu0
  %v279 = vadd.f32 %v182, %v278
  %v280 = vpop.f32.mrf.mxu0
  %281 = vmatprep.mubr.f32.mxu0 0.0
  %282 = vmatmul.mubr.f32.gmra.mxu0 %v200
  %v283 = vpop.f32.mrf.mxu0
  %v284 = vadd.f32 %v187, %v283
  %v285 = vpop.f32.mrf.mxu0
  %286 = vdwg.mxu0
  %v287 = vmax.f32 %v269, 0.0
  %v288 = vmax.f32 %v274, 0.0
  %v289 = vmax.f32 %v279, 0.0
  %v290 = vmax.f32 %v284, 0.0
  %v291 = vld [vmem:[%s5] sm:$0x7]
  %v292 = vld [vmem:[%s6] sm:$0x7]
  %294 = vset.pattern.permute.xlu0 0
  %295 = vperm.xlu0 %294, %v292
  %v296 = vpop.permute.xlu0 %295
  %v299 = vsel %vm189, %v291, 0
  %301 = vmatprep.subr.mxu0 0.0
  %302 = vmatpush1.msra.mxu0 0.0
  %303 = vmatprep.subr.mxu0 0.0
  %304 = vmatpush1.msra.mxu0 0.0
  %305 = vmatprep.subr.mxu0 0.0
  %306 = vmatpush1.msra.mxu0 0.0
  %307 = vmatprep.subr.mxu0 0.0
  %308 = vmatpush1.msra.mxu0 0.0
  %309 = vmatprep.subr.mxu0 0.0
  %310 = vmatpush1.msra.mxu0 0.0
  %311 = vmatprep.subr.mxu0 0.0
  %312 = vmatpush1.msra.mxu0 0.0
  %313 = vmatprep.subr.mxu0 0.0
  %314 = vmatpush1.msra.mxu0 0.0
  %315 = vmatprep.subr.mxu0 0.0
  %316 = vmatpush1.msra.mxu0 0.0
  %317 = vmatprep.subr.mxu0 0.0
  %318 = vmatpush1.msra.mxu0 0.0
  %319 = vmatprep.subr.mxu0 0.0
  %320 = vmatpush1.msra.mxu0 0.0
  %321 = vmatprep.subr.mxu0 0.0
  %322 = vmatpush1.msra.mxu0 0.0
  %323 = vmatprep.subr.mxu0 0.0
  %324 = vmatpush1.msra.mxu0 0.0
  %325 = vmatprep.subr.mxu0 0.0
  %326 = vmatpush1.msra.mxu0 %v290
  %327 = vmatprep.subr.mxu0 0.0
  %328 = vmatpush1.msra.mxu0 %v289
  %329 = vmatprep.subr.mxu0 0.0
  %330 = vmatpush1.msra.mxu0 %v288
  %331 = vmatprep.subr.mxu0 0.0
  %332 = vmatpush1.msra.mxu0 %v287
  %333 = vmatprep.subr.mxu0 0.0
  %334 = vmatpush2.msra.mxu0 0.0
  %335 = vmatprep.subr.mxu0 0.0
  %336 = vmatpush2.msra.mxu0 0.0
  %337 = vmatprep.subr.mxu0 0.0
  %338 = vmatpush2.msra.mxu0 0.0
  %339 = vmatprep.subr.mxu0 0.0
  %340 = vmatpush2.msra.mxu0 0.0
  %341 = vmatprep.subr.mxu0 0.0
  %342 = vmatpush2.msra.mxu0 0.0
  %343 = vmatprep.subr.mxu0 0.0
  %344 = vmatpush2.msra.mxu0 0.0
  %345 = vmatprep.subr.mxu0 0.0
  %346 = vmatpush2.msra.mxu0 0.0
  %347 = vmatprep.subr.mxu0 0.0
  %348 = vmatpush2.msra.mxu0 0.0
  %349 = vmatprep.subr.mxu0 0.0
  %350 = vmatpush2.msra.mxu0 0.0
  %351 = vmatprep.subr.mxu0 0.0
  %352 = vmatpush2.msra.mxu0 0.0
  %353 = vmatprep.subr.mxu0 0.0
  %354 = vmatpush2.msra.mxu0 0.0
  %355 = vmatprep.subr.mxu0 0.0
  %356 = vmatpush2.msra.mxu0 0.0
  %357 = vmatprep.subr.mxu0 0.0
  %358 = vmatpush2.msra.mxu0 0.0
  %359 = vmatprep.subr.mxu0 0.0
  %360 = vmatpush2.msra.mxu0 0.0
  %361 = vmatprep.subr.mxu0 0.0
  %362 = vmatpush2.msra.mxu0 0.0
  %363 = vmatprep.subr.mxu0 0.0
  %364 = vmatpush2.msra.mxu0 0.0
  %365 = vmatprep.mubr.f32.mxu0 0.0
  %366 = vmatmul.mubr.f32.gmra.mxu0 %v299
  %v367 = vpop.f32.mrf.mxu0
  %v368 = vadd.f32 %v296, %v367
  %v369 = vpop.f32.mrf.mxu0
  %370 = vdwg.mxu0
  %371 = vst [vmem:[%s7] sm:$0x7] %v368
  // Predicated region
  $region30: #{valencenet_forward.1} parent=0 // pred_check
    _
  $region31: #{valencenet_forward.1} parent=0 // pred_check_branch
    %373 = sbr.rel (0) target = $region33
  $region32: #{valencenet_forward.1} parent=0 // pred_region
    _
  $region33: #{valencenet_forward.1} parent=0 // pred_fallthru
    _
  // Predicated region
  $region34: #{valencenet_forward.1} parent=0 // pred_check
    _
  $region35: #{valencenet_forward.1} parent=0 // pred_check_branch
    %375 = sbr.rel (0) target = $region37
  $region36: #{valencenet_forward.1} parent=0 // pred_region
    _
  $region37: #{valencenet_forward.1} parent=0 // pred_fallthru
    _

</llo_original>
